<compile_context>
chip_gen: v7x
topology: tpu7x:2x2x1
jax: 0.10.0
libtpu: 0.0.40
codegen_flags: <defaults>
</compile_context>

<pallas_src>
import numpy as np
import jax
import jax.numpy as jnp
from jax import lax
from jax.experimental import pallas as pl
from jax.experimental.pallas import tpu as pltpu


def _round_up(x, m):
    return ((x + m - 1) // m) * m


def _tpu_tuning():
    """Returns (tile_m cap, vmem_limit_bytes) tuned per TPU generation."""
    try:
        kind = jax.devices()[0].device_kind.lower()
    except Exception:
        kind = ""
    if "v7" in kind:                       # v7x: 64 MiB VMEM/TC -> leave headroom
        return 256, 48 * 1024 * 1024
    if "v5 lite" in kind or "v5e" in kind:  # v5e: 128-wide MXU, tighter store slots
        return 128, 96 * 1024 * 1024
    if "v4" in kind or "v5" in kind or "v6" in kind:
        return 256, 96 * 1024 * 1024
    return 256, 48 * 1024 * 1024           # unknown: conservative VMEM budget


def _choose_tile_t(T, d_pad):
    # Streamed bytes per training row: q*xs_train f32 (4 B/elem) + Jx bf16 (2 B/elem).
    # Keep one streamed tile pair <= ~5 MiB so the 2x pipeline buffers stay ~10 MiB,
    # comfortably inside the explicit vmem limit on every generation (incl. v7x).
    budget_rows = (5 * 1024 * 1024) // (6 * d_pad)
    tile = max(256, min(1024, (budget_rows // 256) * 256))
    if T <= tile:
        return max(256, _round_up(T, 256))
    return tile


# ---------------------------------------------------------------------------
# Pallas kernel: for one (T-split, M-block, T-tile) grid point accumulate the
# Matern-5/2 GDML kernel contributions into the VMEM-resident Fs_x output
# block and an Es scratch accumulator.
# ---------------------------------------------------------------------------
def _gdml_kernel(xq_ref, xqsq_ref, yq_ref, j_ref, side_ref,   # inputs
                 fsx_ref, es_ref,                             # outputs (resident over T)
                 es_acc):                                     # VMEM scratch
    t = pl.program_id(2)

    @pl.when(t == 0)
    def _():
        fsx_ref[...] = jnp.zeros_like(fsx_ref)
        es_acc[...] = jnp.zeros_like(es_acc)

    Xq = xq_ref[...]                              # (tm, Dp) f32, q*xs (zero-padded)
    Yq = yq_ref[...]                              # (tt, Dp) f32, q*xs_train tile
    Jb = j_ref[...]                               # (tt, Dp) bf16, Jx_alphas tile
    Xqb = Xq.astype(jnp.bfloat16)
    yq_sq = side_ref[0:1, :]                      # (1, tt)  ||q*xs_train||^2
    yj = side_ref[1:2, :]                         # (1, tt)  rowsum(Yq * J)

    # ||Xq - Yq||^2 = ||Xq||^2 + ||Yq||^2 - 2 Xq@Yq^T.  Cancellation-sensitive,
    # so this single matmul stays f32 (bf16 only for the J-side matmuls below).
    G = lax.dot_general(Xq, Yq, (((1,), (1,)), ((), ())),
                        preferred_element_type=jnp.float32)            # (tm, tt)
    d2 = xqsq_ref[...] + yq_sq - 2.0 * G
    x_dists = jnp.sqrt(jnp.maximum(d2, 0.0))

    # dot[m,t] = (Xq - Yq)[m,t,:].J[t,:] = Xq@J^T - rowsum(Yq*J)        (bf16 MXU)
    dot = lax.dot_general(Xqb, Jb, (((1,), (1,)), ((), ())),
                          preferred_element_type=jnp.float32) - yj

    exp_xs = jnp.exp(-x_dists)        # 5/(3 sig^2) factor applied once in the wrapper
    exp1 = exp_xs * (1.0 + x_dists)
    w = exp_xs * dot

    # term1 - term2 = rowsum(w)*Xq - w@Yq - exp1@J                      (bf16 MXU)
    term1 = (jnp.sum(w, axis=-1, keepdims=True) * Xq
             - jnp.dot(w.astype(jnp.bfloat16), Yq.astype(jnp.bfloat16),
                       preferred_element_type=jnp.float32))
    term2 = jnp.dot(exp1.astype(jnp.bfloat16), Jb,
                    preferred_element_type=jnp.float32)

    fsx_ref[...] += term1 - term2
    es_acc[...] += jnp.sum(exp1 * dot, axis=-1, keepdims=True)

    @pl.when(t == pl.num_programs(2) - 1)
    def _():
        es_ref[...] = es_acc[...]


def _gdml_pairwise(xq, xq_sq, yq, jx_bf16, side, *,
                   tile_m, tile_t, n_split, vmem_limit):
    """Runs the Pallas kernel. Returns un-finalized partial sums:
       fsx (n_split, Mp, Dp) and es (n_split, Mp, 1), to be summed over axis 0."""
    Mp, Dp = xq.shape
    Tp = yq.shape[0]
    assert Mp % tile_m == 0 and Dp % 128 == 0
    assert Tp % (n_split * tile_t) == 0
    tps = Tp // (n_split * tile_t)               # T tiles per split

    fsx, es = pl.pallas_call(
        _gdml_kernel,
        out_shape=(jax.ShapeDtypeStruct((n_split, Mp, Dp), jnp.float32),
                   jax.ShapeDtypeStruct((n_split, Mp, 1), jnp.float32)),
        grid_spec=pltpu.PrefetchScalarGridSpec(
            num_scalar_prefetch=0,
            grid=(n_split, Mp // tile_m, tps),
            in_specs=[
                pl.BlockSpec((tile_m, Dp), lambda s, m, t: (m, 0)),      # q*xs (resident)
                pl.BlockSpec((tile_m, 1), lambda s, m, t: (m, 0)),       # ||q*xs||^2
                pl.BlockSpec((tile_t, Dp),
                             lambda s, m, t: (s * tps + t, 0)),          # q*xs_train (f32 stream)
                pl.BlockSpec((tile_t, Dp),
                             lambda s, m, t: (s * tps + t, 0)),          # Jx_alphas (bf16 stream)
                pl.BlockSpec((2, tile_t),
                             lambda s, m, t: (0, s * tps + t)),          # [||Yq||^2 ; rowsum(Yq*J)]
            ],
            out_specs=[
                pl.BlockSpec((None, tile_m, Dp), lambda s, m, t: (s, m, 0)),  # Fs_x partial
                pl.BlockSpec((None, tile_m, 1), lambda s, m, t: (s, m, 0)),   # Es partial
            ],
            scratch_shapes=[pltpu.VMEM((tile_m, 1), jnp.float32)],
        ),
        compiler_params=pltpu.CompilerParams(
            dimension_semantics=("parallel", "parallel", "arbitrary"),
            vmem_limit_bytes=vmem_limit),
    )(xq, xq_sq, yq, jx_bf16, side)
    return fsx, es


# ---------------------------------------------------------------------------
# Module-equivalent wrapper (mirrors GDMLTorchPredict.__init__ / forward).
# ---------------------------------------------------------------------------
class GDMLPallasPredict:
    def __init__(self, model, lat_and_inv=None, tile_t=None):
        if lat_and_inv is not None or 'lattice' in model:
            # TODO(synk): periodic (lattice) minimum-image wrapping of diffs not implemented.
            raise NotImplementedError("lattice/PBC path not supported")
        self._sig = int(model['sig'])
        self._c = float(model['c'])
        self._std = float(model.get('std', 1))
        self.n_atoms = model['z'].shape[0]
        desc_siz = model['R_desc'].shape[0]
        n_perms, self._n_atoms = model['perms'].shape
        self.n_perms = n_perms

        sig = self._sig
        self._q = float(np.sqrt(5.0) / sig)
        self._coef = 5.0 / (3.0 * sig * sig)

        self._tile_m_cap, self._vmem_limit = _tpu_tuning()

        # Same permutation-expansion glue as the torch __init__, in plain JAX.
        perm_idxs = jnp.asarray(model['tril_perms_lin'],
                                jnp.int32).reshape(-1, n_perms).T     # (n_perms, desc_siz)

        def expand(xs):                                   # xs: (n_train, desc_siz)
            rep = jnp.tile(xs, (1, n_perms))              # (n_train, desc_siz*n_perms)
            return rep[:, perm_idxs].reshape(-1, desc_siz)

        R_desc_t = jnp.asarray(model['R_desc'], jnp.float32).T        # (n_train, desc_siz)
        Jxa = jnp.asarray(np.array(model['R_d_desc_alpha']), jnp.float32)
        self._xs_train = expand(R_desc_t)                 # (T, D) f32 — kept for reference check
        self._Jx_alphas = expand(Jxa)                     # (T, D) f32 — kept for reference check

        T, D = self._xs_train.shape
        self._D = D
        # 256-aligned descriptor lanes: full-width MXU passes on v6e/v7x (128-ok on v5e).
        self._D_pad = max(256, _round_up(D, 256))

        if tile_t is None:
            tile_t = _choose_tile_t(T, self._D_pad)
        assert tile_t % 128 == 0, "tile_t must be a multiple of 128"
        self._tile_t = tile_t
        T_pad = _round_up(T, tile_t)
        self._n_t_tiles = T_pad // tile_t

        # Hoisted constant work: q-scaled, zero-padded training tensors.  Yq stays
        # f32 (feeds the cancellation-sensitive Gram matmul); Jx_alphas is streamed
        # in bf16 (J-side matmuls only); per-row scalars are precomputed in f32.
        yq = jnp.zeros((T_pad, self._D_pad), jnp.float32)
        yq = yq.at[:T, :D].set(self._q * self._xs_train)
        jx = jnp.zeros((T_pad, self._D_pad), jnp.float32)
        jx = jx.at[:T, :D].set(self._Jx_alphas)
        self._Yq_pad = yq                                               # (T_pad, D_pad) f32
        self._J_pad = jx.astype(jnp.bfloat16)                           # (T_pad, D_pad) bf16
        self._side = jnp.stack([jnp.sum(yq * yq, axis=-1),
                                jnp.sum(yq * jx, axis=-1)], axis=0)     # (2, T_pad) f32

    def forward(self, Rs):
        assert Rs.ndim == 3 and Rs.shape[1:] == (self._n_atoms, 3)
        # TODO(synk): torch casts to float64; Mosaic TPU has no f64, so compute in f32/bf16.
        Rs = jnp.asarray(Rs, jnp.float32)
        M, N, _ = Rs.shape
        D, D_pad = self._D, self._D_pad

        diffs = Rs[:, :, None, :] - Rs[:, None, :, :]                 # (M, N, N, 3)
        dists = jnp.linalg.norm(diffs, axis=-1)                       # (M, N, N)
        i, j = np.tril_indices(N, k=-1)
        xs = 1.0 / dists[:, i, j]                                     # (M, D)

        # Pad the molecule batch (sublanes) and descriptor lanes with zeros AFTER
        # the 1/dists gather so padded entries contribute exactly zero.
        tile_m = min(_round_up(M, 8), self._tile_m_cap)
        M_pad = _round_up(M, tile_m)
        xq = jnp.zeros((M_pad, D_pad), jnp.float32).at[:M, :D].set(self._q * xs)
        xq_sq = jnp.sum(xq * xq, axis=-1, keepdims=True)              # (M_pad, 1)

        # Split the T reduction across a leading size-2 "parallel" axis when the
        # batch occupies a single M-block (keeps v7x's second TensorCore busy);
        # neutral on single-TC v5e/v6e.
        m_blocks = M_pad // tile_m
        n_split = 2 if (m_blocks == 1 and self._n_t_tiles >= 2
                        and self._n_t_tiles % 2 == 0) else 1

        fsx_parts, es_parts = _gdml_pairwise(
            xq, xq_sq, self._Yq_pad, self._J_pad, self._side,
            tile_m=tile_m, tile_t=self._tile_t, n_split=n_split,
            vmem_limit=self._vmem_limit)

        # Finalize in the wrapper (cheap O(M*D)) so T-split partials are plain sums:
        # Fs_x = coef * sum * xs^3 ; Es = coef * sum / q * std + c.
        fsx = jnp.sum(fsx_parts, axis=0)[:M, :D]
        es_sum = jnp.sum(es_parts, axis=0)[:M, 0]
        Fs_x = self._coef * fsx * (xs ** 3)
        Es = self._coef * es_sum / self._q * self._std + self._c

        scale = jnp.zeros((M, N, N), Rs.dtype)
        scale = scale.at[:, i, j].set(Fs_x).at[:, j, i].set(Fs_x)
        Fs = (diffs * scale[..., None]).sum(axis=1) * self._std       # (M, N, 3)
        return Es, Fs

    __call__ = forward


# ---------------------------------------------------------------------------
# Pure-JAX reference (mirrors the torch _forward math) for a sanity check.
# ---------------------------------------------------------------------------
def _reference_forward(Rs, xs_train, jx_alphas, sig, std, c):
    Rs = jnp.asarray(Rs, jnp.float32)
    q = np.sqrt(5.0) / sig
    N = Rs.shape[1]
    diffs = Rs[:, :, None, :] - Rs[:, None, :, :]
    dists = jnp.linalg.norm(diffs, axis=-1)
    i, j = np.tril_indices(N, k=-1)
    xs = 1.0 / dists[:, i, j]
    x_diffs = (q * xs)[:, None, :] - q * xs_train[None, :, :]
    x_dists = jnp.linalg.norm(x_diffs, axis=-1)
    exp_xs = 5.0 / (3.0 * sig ** 2) * jnp.exp(-x_dists)
    dot = jnp.einsum('ijk,jk->ij', x_diffs, jx_alphas)
    exp1 = exp_xs * (1.0 + x_dists)
    Fs_x = jnp.einsum('ij,ij,ijk->ik', exp_xs, dot, x_diffs)
    Fs_x = Fs_x - exp1 @ jx_alphas
    Fs_x = Fs_x * xs ** 3
    scale = jnp.zeros(dists.shape, Rs.dtype).at[:, i, j].set(Fs_x).at[:, j, i].set(Fs_x)
    Fs = (diffs * scale[..., None]).sum(axis=1) * std
    Es = jnp.einsum('ij,ij->i', exp1, dot) / q * std + c
    return Es, Fs


if __name__ == "__main__":
    # Small, GDML-consistent shapes chosen to exercise: M padding (4 -> 8),
    # D padding (28 -> 256), T padding (1000 -> 1024), the 2-way T split
    # (single M-block) and multi-tile accumulation along T (2 tiles / split).
    M, N = 4, 8                    # 4 molecules, 8 atoms
    D = N * (N - 1) // 2           # 28 descriptor entries
    n_train, n_perms = 250, 4      # T = 1000 expanded training points
    sig, c, std = 10, -1.2345, 1.5

    key = jax.random.PRNGKey(0)
    kR, kD, kA, kP = jax.random.split(key, 4)
    R_desc = jax.random.uniform(kD, (D, n_train), jnp.float32, minval=0.2, maxval=1.0)
    R_d_desc_alpha = jax.random.normal(kA, (n_train, D), jnp.float32)
    perm_idxs_np = np.array(jax.random.randint(kP, (n_perms, D), 0, D * n_perms),
                            dtype=np.int32)
    tril_perms_lin = perm_idxs_np.T.reshape(-1)     # matches .view(-1, n_perms).t()

    model = {
        'sig': sig, 'c': c, 'std': std,
        'z': np.zeros(N, dtype=np.int64),
        'perms': np.zeros((n_perms, N), dtype=np.int64),
        'R_desc': np.array(R_desc),
        'R_d_desc_alpha': np.array(R_d_desc_alpha),
        'tril_perms_lin': tril_perms_lin,
    }

    Rs = jax.random.normal(kR, (M, N, 3), jnp.float32) * 1.5

    predictor = GDMLPallasPredict(model, tile_t=256)   # grid (2 splits, 1 M-block, 2 T-tiles)
    Es, Fs = predictor(Rs)
    jax.block_until_ready((Es, Fs))
    assert Es.shape == (M,) and Fs.shape == (M, N, 3)

    # Correctness check against a pure-JAX f32 mirror of the torch math.  The
    # kernel streams the J-side matmuls in bf16, so use a normalized max-error
    # criterion (robust to elementwise cancellation) with a mixed-precision bound.
    Es_ref, Fs_ref = _reference_forward(Rs, predictor._xs_train,
                                        predictor._Jx_alphas, sig, std, c)
    Es_np, Fs_np = np.array(Es), np.array(Fs)
    Es_r, Fs_r = np.array(Es_ref), np.array(Fs_ref)
    err_es = np.max(np.abs(Es_np - Es_r)) / max(np.max(np.abs(Es_r)), 1e-6)
    err_fs = np.max(np.abs(Fs_np - Fs_r)) / max(np.max(np.abs(Fs_r)), 1e-6)
    assert err_es < 2e-2 and err_fs < 2e-2, (err_es, err_fs)

    print("KERNEL_OK")
</pallas_src>

<mosaic_0001>
module attributes {stable_mosaic.version = 11 : i64} {
  func.func @_gdml_kernel(%arg0: i32, %arg1: i32, %arg2: i32, %arg3: memref<8x256xf32, #tpu.memory_space<vmem>>, %arg4: memref<8x1xf32, #tpu.memory_space<vmem>>, %arg5: memref<256x256xf32, #tpu.memory_space<vmem>>, %arg6: memref<256x256xbf16, #tpu.memory_space<vmem>>, %arg7: memref<2x256xf32, #tpu.memory_space<vmem>>, %arg8: memref<1x8x256xf32, #tpu.memory_space<vmem>>, %arg9: memref<1x8x1xf32, #tpu.memory_space<vmem>>, %arg10: memref<8x1xf32, #tpu.memory_space<vmem>>) attributes {dimension_semantics = [#tpu.dimension_semantics<parallel>, #tpu.dimension_semantics<parallel>, #tpu.dimension_semantics<arbitrary>], iteration_bounds = array<i64: 2, 1, 2>, scalar_prefetch = 0 : i64, scratch_operands = 1 : i64, tpu.core_type = #tpu.core_type<tc>, window_params = [{transform_indices = @transform_0, window_bounds = array<i64: 8, 256>}, {transform_indices = @transform_1, window_bounds = array<i64: 8, 1>}, {transform_indices = @transform_2, window_bounds = array<i64: 256, 256>}, {transform_indices = @transform_3, window_bounds = array<i64: 256, 256>}, {transform_indices = @transform_4, window_bounds = array<i64: 2, 256>}, {transform_indices = @transform_5, window_bounds = array<i64: 1, 8, 256>}, {transform_indices = @transform_6, window_bounds = array<i64: 1, 8, 1>}]} {
    %c0_i32 = arith.constant 0 : i32
    %0 = arith.cmpi eq, %arg2, %c0_i32 : i32
    %1 = arith.extui %0 : i1 to i32
    %c0_i32_0 = arith.constant 0 : i32
    %2 = arith.cmpi ne, %1, %c0_i32_0 : i32
    scf.if %2 {
      %cst_31 = arith.constant 0.000000e+00 : f32
      %56 = vector.broadcast %cst_31 : f32 to vector<8x256xf32>
      %c0_32 = arith.constant 0 : index
      %c0_33 = arith.constant 0 : index
      %c0_34 = arith.constant 0 : index
      %57 = vector.load %arg8[%c0_32, %c0_33, %c0_34] : memref<1x8x256xf32, #tpu.memory_space<vmem>>, vector<1x8x256xf32>
      %58 = vector.shape_cast %57 : vector<1x8x256xf32> to vector<8x256xf32>
      %59 = vector.shape_cast %56 : vector<8x256xf32> to vector<1x8x256xf32>
      tpu.vector_store %arg8[%c0_32, %c0_33, %c0_34], %59 {strides = array<i32>} : memref<1x8x256xf32, #tpu.memory_space<vmem>>, vector<1x8x256xf32>,
      %cst_35 = arith.constant 0.000000e+00 : f32
      %60 = vector.broadcast %cst_35 : f32 to vector<8x1xf32>
      %c0_36 = arith.constant 0 : index
      %c0_37 = arith.constant 0 : index
      %61 = vector.load %arg10[%c0_36, %c0_37] : memref<8x1xf32, #tpu.memory_space<vmem>>, vector<8x1xf32>
      tpu.vector_store %arg10[%c0_36, %c0_37], %60 {strides = array<i32>} : memref<8x1xf32, #tpu.memory_space<vmem>>, vector<8x1xf32>,
    } else {
    }
    %c0 = arith.constant 0 : index
    %c0_1 = arith.constant 0 : index
    %3 = vector.load %arg3[%c0, %c0_1] : memref<8x256xf32, #tpu.memory_space<vmem>>, vector<8x256xf32>
    %c0_2 = arith.constant 0 : index
    %c0_3 = arith.constant 0 : index
    %4 = vector.load %arg5[%c0_2, %c0_3] : memref<256x256xf32, #tpu.memory_space<vmem>>, vector<256x256xf32>
    %c0_4 = arith.constant 0 : index
    %c0_5 = arith.constant 0 : index
    %5 = vector.load %arg6[%c0_4, %c0_5] : memref<256x256xbf16, #tpu.memory_space<vmem>>, vector<256x256xbf16>
    %6 = arith.truncf %3 : vector<8x256xf32> to vector<8x256xbf16>
    %c0_6 = arith.constant 0 : index
    %c0_7 = arith.constant 0 : index
    %7 = vector.load %arg7[%c0_6, %c0_7] : memref<2x256xf32, #tpu.memory_space<vmem>>, vector<1x256xf32>
    %c1 = arith.constant 1 : index
    %c0_8 = arith.constant 0 : index
    %8 = vector.load %arg7[%c1, %c0_8] : memref<2x256xf32, #tpu.memory_space<vmem>>, vector<1x256xf32>
    %cst = arith.constant dense<0.000000e+00> : vector<8x256xf32>
    %9 = tpu.matmul %3, %4, %cst {dimension_numbers = #tpu.dot_dimension_numbers<[1], [1], [0], [0], [0, 0, 1, 0], [], []>} : vector<8x256xf32>, vector<256x256xf32>, vector<8x256xf32> -> vector<8x256xf32>
    %c0_9 = arith.constant 0 : index
    %c0_10 = arith.constant 0 : index
    %10 = vector.load %arg4[%c0_9, %c0_10] : memref<8x1xf32, #tpu.memory_space<vmem>>, vector<8x1xf32>
    %11 = vector.broadcast %10 : vector<8x1xf32> to vector<8x256xf32>
    %12 = vector.broadcast %7 : vector<1x256xf32> to vector<8x256xf32>
    %13 = arith.addf %11, %12 : vector<8x256xf32>
    %cst_11 = arith.constant 2.000000e+00 : f32
    %14 = vector.broadcast %cst_11 : f32 to vector<8x256xf32>
    %15 = arith.mulf %14, %9 : vector<8x256xf32>
    %16 = arith.subf %13, %15 : vector<8x256xf32>
    %cst_12 = arith.constant 0.000000e+00 : f32
    %17 = vector.broadcast %cst_12 : f32 to vector<8x256xf32>
    %18 = arith.maximumf %16, %17 : vector<8x256xf32>
    %19 = math.sqrt %18 : vector<8x256xf32>
    %cst_13 = arith.constant dense<0.000000e+00> : vector<8x256xf32>
    %20 = tpu.matmul %6, %5, %cst_13 {dimension_numbers = #tpu.dot_dimension_numbers<[1], [1], [0], [0], [0, 0, 1, 0], [], []>} : vector<8x256xbf16>, vector<256x256xbf16>, vector<8x256xf32> -> vector<8x256xf32>
    %21 = vector.broadcast %8 : vector<1x256xf32> to vector<8x256xf32>
    %22 = arith.subf %20, %21 : vector<8x256xf32>
    %cst_14 = arith.constant 0.000000e+00 : f32
    %23 = vector.broadcast %cst_14 : f32 to vector<8x256xf32>
    %24 = arith.subf %23, %19 : vector<8x256xf32>
    %25 = math.exp %24 : vector<8x256xf32>
    %cst_15 = arith.constant 1.000000e+00 : f32
    %26 = vector.broadcast %cst_15 : f32 to vector<8x256xf32>
    %27 = arith.addf %26, %19 : vector<8x256xf32>
    %28 = arith.mulf %25, %27 : vector<8x256xf32>
    %29 = arith.mulf %25, %22 : vector<8x256xf32>
    %cst_16 = arith.constant dense<0.000000e+00> : vector<8xf32>
    %30 = vector.multi_reduction <add>, %29, %cst_16 [1] : vector<8x256xf32> to vector<8xf32>
    %31 = vector.shape_cast %30 : vector<8xf32> to vector<8x1xf32>
    %32 = vector.broadcast %31 : vector<8x1xf32> to vector<8x256xf32>
    %33 = arith.mulf %32, %3 : vector<8x256xf32>
    %34 = arith.truncf %29 : vector<8x256xf32> to vector<8x256xbf16>
    %35 = arith.truncf %4 : vector<256x256xf32> to vector<256x256xbf16>
    %cst_17 = arith.constant dense<0.000000e+00> : vector<8x256xf32>
    %36 = tpu.matmul %34, %35, %cst_17 {dimension_numbers = #tpu.dot_dimension_numbers<[1], [0], [0], [1], [0, 0, 1, 1], [], []>} : vector<8x256xbf16>, vector<256x256xbf16>, vector<8x256xf32> -> vector<8x256xf32>
    %37 = arith.subf %33, %36 : vector<8x256xf32>
    %38 = arith.truncf %28 : vector<8x256xf32> to vector<8x256xbf16>
    %cst_18 = arith.constant dense<0.000000e+00> : vector<8x256xf32>
    %39 = tpu.matmul %38, %5, %cst_18 {dimension_numbers = #tpu.dot_dimension_numbers<[1], [0], [0], [1], [0, 0, 1, 1], [], []>} : vector<8x256xbf16>, vector<256x256xbf16>, vector<8x256xf32> -> vector<8x256xf32>
    %c0_19 = arith.constant 0 : index
    %c0_20 = arith.constant 0 : index
    %c0_21 = arith.constant 0 : index
    %40 = vector.load %arg8[%c0_19, %c0_20, %c0_21] : memref<1x8x256xf32, #tpu.memory_space<vmem>>, vector<1x8x256xf32>
    %41 = vector.shape_cast %40 : vector<1x8x256xf32> to vector<8x256xf32>
    %42 = arith.subf %37, %39 : vector<8x256xf32>
    %43 = arith.addf %41, %42 : vector<8x256xf32>
    %c0_22 = arith.constant 0 : index
    %c0_23 = arith.constant 0 : index
    %c0_24 = arith.constant 0 : index
    %44 = vector.load %arg8[%c0_22, %c0_23, %c0_24] : memref<1x8x256xf32, #tpu.memory_space<vmem>>, vector<1x8x256xf32>
    %45 = vector.shape_cast %44 : vector<1x8x256xf32> to vector<8x256xf32>
    %46 = vector.shape_cast %43 : vector<8x256xf32> to vector<1x8x256xf32>
    tpu.vector_store %arg8[%c0_22, %c0_23, %c0_24], %46 {strides = array<i32>} : memref<1x8x256xf32, #tpu.memory_space<vmem>>, vector<1x8x256xf32>,
    %c0_25 = arith.constant 0 : index
    %c0_26 = arith.constant 0 : index
    %47 = vector.load %arg10[%c0_25, %c0_26] : memref<8x1xf32, #tpu.memory_space<vmem>>, vector<8x1xf32>
    %48 = arith.mulf %28, %22 : vector<8x256xf32>
    %cst_27 = arith.constant dense<0.000000e+00> : vector<8xf32>
    %49 = vector.multi_reduction <add>, %48, %cst_27 [1] : vector<8x256xf32> to vector<8xf32>
    %50 = vector.shape_cast %49 : vector<8xf32> to vector<8x1xf32>
    %51 = arith.addf %47, %50 : vector<8x1xf32>
    %c0_28 = arith.constant 0 : index
    %c0_29 = arith.constant 0 : index
    %52 = vector.load %arg10[%c0_28, %c0_29] : memref<8x1xf32, #tpu.memory_space<vmem>>, vector<8x1xf32>
    tpu.vector_store %arg10[%c0_28, %c0_29], %51 {strides = array<i32>} : memref<8x1xf32, #tpu.memory_space<vmem>>, vector<8x1xf32>,
    %c1_i32 = arith.constant 1 : i32
    %53 = arith.cmpi eq, %arg2, %c1_i32 : i32
    %54 = arith.extui %53 : i1 to i32
    %c0_i32_30 = arith.constant 0 : i32
    %55 = arith.cmpi ne, %54, %c0_i32_30 : i32
    scf.if %55 {
      %c0_31 = arith.constant 0 : index
      %c0_32 = arith.constant 0 : index
      %56 = vector.load %arg10[%c0_31, %c0_32] : memref<8x1xf32, #tpu.memory_space<vmem>>, vector<8x1xf32>
      %c0_33 = arith.constant 0 : index
      %c0_34 = arith.constant 0 : index
      %c0_35 = arith.constant 0 : index
      %57 = vector.load %arg9[%c0_33, %c0_34, %c0_35] : memref<1x8x1xf32, #tpu.memory_space<vmem>>, vector<1x8x1xf32>
      %58 = vector.shape_cast %57 : vector<1x8x1xf32> to vector<8x1xf32>
      %59 = vector.shape_cast %56 : vector<8x1xf32> to vector<1x8x1xf32>
      tpu.vector_store %arg9[%c0_33, %c0_34, %c0_35], %59 {strides = array<i32>} : memref<1x8x1xf32, #tpu.memory_space<vmem>>, vector<1x8x1xf32>,
    } else {
    }
    return
  }
  func.func @transform_0(%arg0: i32, %arg1: i32, %arg2: i32) -> (i32, i32) {
    %c0_i32 = arith.constant 0 : i32
    %c0_i32_0 = arith.constant 0 : i32
    return %arg1, %c0_i32 : i32, i32
  }
  func.func @transform_1(%arg0: i32, %arg1: i32, %arg2: i32) -> (i32, i32) {
    %c0_i32 = arith.constant 0 : i32
    %c0_i32_0 = arith.constant 0 : i32
    return %arg1, %c0_i32 : i32, i32
  }
  func.func @transform_2(%arg0: i32, %arg1: i32, %arg2: i32) -> (i32, i32) {
    %c2_i32 = arith.constant 2 : i32
    %0 = arith.muli %arg0, %c2_i32 : i32
    %1 = arith.addi %0, %arg2 : i32
    %c0_i32 = arith.constant 0 : i32
    %c0_i32_0 = arith.constant 0 : i32
    return %1, %c0_i32 : i32, i32
  }
  func.func @transform_3(%arg0: i32, %arg1: i32, %arg2: i32) -> (i32, i32) {
    %c2_i32 = arith.constant 2 : i32
    %0 = arith.muli %arg0, %c2_i32 : i32
    %1 = arith.addi %0, %arg2 : i32
    %c0_i32 = arith.constant 0 : i32
    %c0_i32_0 = arith.constant 0 : i32
    return %1, %c0_i32 : i32, i32
  }
  func.func @transform_4(%arg0: i32, %arg1: i32, %arg2: i32) -> (i32, i32) {
    %c2_i32 = arith.constant 2 : i32
    %0 = arith.muli %arg0, %c2_i32 : i32
    %1 = arith.addi %0, %arg2 : i32
    %c0_i32 = arith.constant 0 : i32
    %c0_i32_0 = arith.constant 0 : i32
    return %c0_i32, %1 : i32, i32
  }
  func.func @transform_5(%arg0: i32, %arg1: i32, %arg2: i32) -> (i32, i32, i32) {
    %c0_i32 = arith.constant 0 : i32
    %c0_i32_0 = arith.constant 0 : i32
    return %arg0, %arg1, %c0_i32 : i32, i32, i32
  }
  func.func @transform_6(%arg0: i32, %arg1: i32, %arg2: i32) -> (i32, i32, i32) {
    %c0_i32 = arith.constant 0 : i32
    %c0_i32_0 = arith.constant 0 : i32
    return %arg0, %arg1, %c0_i32 : i32, i32, i32
  }
}

</mosaic_0001>

<llo_original>
// kernel: tpu_custom_call.1
$region0: #{tpu_custom_call.1}
  #allocation0 [shape = 'u32[]', space=smem, size = 0x4, offset = 0x4, fixed_abs, tag = 'smem constant byte address 0x4 - core index']
  #allocation1 [shape = 'u32[144,128]{1,0:T(1,128)}', space=vmem, size = 0x12000, scoped, tag = 'internal scratch']
  #allocation2 [shape = 'f32[8,1]{1,0:T(8,128)}', space=vmem, size = 0x1000, scoped, tag = 'scratch operand']
  %s0 = inlined_call_operand.hbm [shape: f32[8,256], index: 0, kind: input, shape index: {}]
  %s1 = inlined_call_operand.vmem [shape: f32[8,1], index: 1, kind: input, shape index: {}]
  %s2 = inlined_call_operand.hbm [shape: f32[1024,256], index: 2, kind: input, shape index: {}]
  %s3 = inlined_call_operand.hbm [shape: bf16[1024,256], index: 3, kind: input, shape index: {}]
  %s4 = inlined_call_operand.vmem [shape: f32[2,1024], index: 4, kind: input, shape index: {}]
  %s5 = inlined_call_operand.hbm [shape: f32[2,8,256], index: 5, kind: output, shape index: {0}]
  %s6 = inlined_call_operand.vmem [shape: f32[2,8,1], index: 6, kind: output, shape index: {1}]
  %7 = xla_tuple %s5, %s6
  %s8 = sld [smem:[#allocation0]]
  $region81: #{tpu_custom_call.1} parent=0
    _
  %s10 = ssub.s32 1, %s8
  %s11 = scalar_select 0, %s10, %s8
  $region1: #{tpu_custom_call.1} parent=0
    #allocation3 [shape = 'u8[8192]{0}', space=vmem, size = 0x2000, scoped, tag = 'input window, operand 0, single buffered']
    #allocation4 [shape = 's32[2]{0}', space=sflag, size = 0x8, scoped, tag = 'scoped memory for tpu_custom_call.1']
    #allocation5 [shape = 's32[2]{0}', space=sflag, size = 0x8, scoped, tag = 'scoped memory for tpu_custom_call.1']
    #allocation6 [shape = 'u8[524288]{0}', space=vmem, size = 0x80000, scoped, tag = 'input window, operand 2']
    #allocation7 [shape = 's32[2]{0}', space=sflag, size = 0x8, scoped, tag = 'scoped memory for tpu_custom_call.1']
    #allocation8 [shape = 'u8[262144]{0}', space=vmem, size = 0x40000, scoped, tag = 'input window, operand 3']
    #allocation9 [shape = 'u8[16384]{0}', space=vmem, size = 0x4000, scoped, tag = 'output window, operand 0']
    %12 = vsyncpa [#allocation4], 0
    %13 = vsyncpa [#allocation7], 0
    %s14 = scalar_lea.sflag [#allocation7], 1
    %15 = vsyncpa %s14, 0
    %16 = vsyncpa [#allocation5], 0
    %s17 = scalar_lea.sflag [#allocation5], 1
    %18 = vsyncpa %s17, 0
    loop: start=0, step=1, limit=6
    $region2: #{tpu_custom_call.1} parent=1 // loop_pre_header
      _
    $region3: #{tpu_custom_call.1} parent=1 // loop_header
      %s20 = sphi 0, %s24
      %p21 = scmp.ge.s32.totalorder %s20, 6
      %s27 = sphi 0, %s46
      %s28 = sphi 0, %s42
      %s29 = sphi 0, %s38
      %s30 = sphi 0, %s27
      %s31 = sphi 0, %s28
      %s32 = sphi 0, %s29
      %s33 = sphi 0, %s30
      %s34 = sphi 0, %s31
      %s35 = sphi 0, %s32
      %s49 = sphi 0, %s51
      %s52 = sphi 0, %s49
      %s53 = sphi 0, %s52
      %s69 = sphi 0, %s53
      %s75 = sphi 0, %s77
      %s78 = sphi 0, %s75
      %s79 = sphi 0, %s78
      %s95 = sphi 0, %s79
      %s105 = sphi 0, %s107
      %s108 = sphi 0, %s105
      %s109 = sphi 0, %s108
      %s125 = sphi 0, %s109
      %s135 = sphi 0, %s137
      %s138 = sphi 0, %s135
      %s139 = sphi 0, %s138
      %s155 = sphi 0, %s139
      %s165 = sphi 0, %s167
      %s168 = sphi 0, %s165
      %s169 = sphi 0, %s168
      %s185 = sphi 0, %s169
      %s193 = sphi 0, %s195
      %s196 = sphi 0, %s193
      %s197 = sphi 0, %s196
      %s213 = sphi 0, %s197
      %s221 = sphi 0, %s223
      %s224 = sphi 0, %s221
      %s225 = sphi 0, %s224
      %s241 = sphi 0, %s225
    $region4: #{tpu_custom_call.1} parent=1 // loop_header_branch
      %23 = sbr.rel (%p21) target = $region8
    $region5: #{tpu_custom_call.1} parent=1 // loop_body
      %s25 = ssub.s32 %s20, 1
      %s26 = ssub.s32 %s20, 2
      %s36 = sadd.s32 1, %s29
      %p37 = scmp.ge.s32.totalorder %s36, 2
      %s38 = scalar_select %p37, 0, %s36
      %s39 = sadd.s32 1, %s28
      %s40 = scalar_select %p37, %s39, %s28
      %p41 = scmp.ge.s32.totalorder %s40, 1
      %s42 = scalar_select %p41, 0, %s40
      %s43 = sadd.s32 1, %s27
      %s44 = scalar_select %p41, %s43, %s27
      %p45 = scmp.ge.s32.totalorder %s44, 2
      %s46 = scalar_select %p45, 0, %s44
      %s47 = ssub.s32 %s28, %s42
      %p48 = scmp.eq.s32.totalorder %s47, 0
      %s50 = sadd.s32 %s49, 1
      %s51 = scalar_select %p48, %s49, %s50
      %p54 = pneg %p48
      %p55 = scmp.eq.s32.totalorder %s20, 3
      %p56 = por %p54, %p55
      %p57 = scmp.ne.s32.totalorder %s49, %s52
      %p58 = scmp.eq.s32.totalorder %s20, 0
      %p59 = por %p57, %p58
      %p60 = scmp.ne.s32.totalorder %s49, %s52
      %p61 = scmp.eq.s32.totalorder %s25, 3
      %p62 = por %p60, %p61
      %p63 = scmp.ne.s32.totalorder %s52, %s53
      %p64 = scmp.eq.s32.totalorder %s25, 0
      %p65 = por %p63, %p64
      %p66 = scmp.ne.s32.totalorder %s52, %s53
      %p67 = scmp.eq.s32.totalorder %s26, 3
      %p68 = por %p66, %p67
      %p70 = scmp.ne.s32.totalorder %s53, %s69
      %p71 = scmp.eq.s32.totalorder %s26, 0
      %p72 = por %p70, %p71
      %s73 = ssub.s32 %s28, %s42
      %p74 = scmp.eq.s32.totalorder %s73, 0
      %s76 = sadd.s32 %s75, 1
      %s77 = scalar_select %p74, %s75, %s76
      %p80 = pneg %p74
      %p81 = scmp.eq.s32.totalorder %s20, 3
      %p82 = por %p80, %p81
      %p83 = scmp.ne.s32.totalorder %s75, %s78
      %p84 = scmp.eq.s32.totalorder %s20, 0
      %p85 = por %p83, %p84
      %p86 = scmp.ne.s32.totalorder %s75, %s78
      %p87 = scmp.eq.s32.totalorder %s25, 3
      %p88 = por %p86, %p87
      %p89 = scmp.ne.s32.totalorder %s78, %s79
      %p90 = scmp.eq.s32.totalorder %s25, 0
      %p91 = por %p89, %p90
      %p92 = scmp.ne.s32.totalorder %s78, %s79
      %p93 = scmp.eq.s32.totalorder %s26, 3
      %p94 = por %p92, %p93
      %p96 = scmp.ne.s32.totalorder %s79, %s95
      %p97 = scmp.eq.s32.totalorder %s26, 0
      %p98 = por %p96, %p97
      %s99 = smul.u32 %s27, 2
      %s100 = sadd.s32 %s99, %s29
      %s101 = smul.u32 %s46, 2
      %s102 = sadd.s32 %s101, %s38
      %s103 = ssub.s32 %s100, %s102
      %p104 = scmp.eq.s32.totalorder %s103, 0
      %s106 = sadd.s32 %s105, 1
      %s107 = scalar_select %p104, %s105, %s106
      %p110 = pneg %p104
      %p111 = scmp.eq.s32.totalorder %s20, 3
      %p112 = por %p110, %p111
      %p113 = scmp.ne.s32.totalorder %s105, %s108
      %p114 = scmp.eq.s32.totalorder %s20, 0
      %p115 = por %p113, %p114
      %p116 = scmp.ne.s32.totalorder %s105, %s108
      %p117 = scmp.eq.s32.totalorder %s25, 3
      %p118 = por %p116, %p117
      %p119 = scmp.ne.s32.totalorder %s108, %s109
      %p120 = scmp.eq.s32.totalorder %s25, 0
      %p121 = por %p119, %p120
      %p122 = scmp.ne.s32.totalorder %s108, %s109
      %p123 = scmp.eq.s32.totalorder %s26, 3
      %p124 = por %p122, %p123
      %p126 = scmp.ne.s32.totalorder %s109, %s125
      %p127 = scmp.eq.s32.totalorder %s26, 0
      %p128 = por %p126, %p127
      %s129 = smul.u32 %s27, 2
      %s130 = sadd.s32 %s129, %s29
      %s131 = smul.u32 %s46, 2
      %s132 = sadd.s32 %s131, %s38
      %s133 = ssub.s32 %s130, %s132
      %p134 = scmp.eq.s32.totalorder %s133, 0
      %s136 = sadd.s32 %s135, 1
      %s137 = scalar_select %p134, %s135, %s136
      %p140 = pneg %p134
      %p141 = scmp.eq.s32.totalorder %s20, 3
      %p142 = por %p140, %p141
      %p143 = scmp.ne.s32.totalorder %s135, %s138
      %p144 = scmp.eq.s32.totalorder %s20, 0
      %p145 = por %p143, %p144
      %p146 = scmp.ne.s32.totalorder %s135, %s138
      %p147 = scmp.eq.s32.totalorder %s25, 3
      %p148 = por %p146, %p147
      %p149 = scmp.ne.s32.totalorder %s138, %s139
      %p150 = scmp.eq.s32.totalorder %s25, 0
      %p151 = por %p149, %p150
      %p152 = scmp.ne.s32.totalorder %s138, %s139
      %p153 = scmp.eq.s32.totalorder %s26, 3
      %p154 = por %p152, %p153
      %p156 = scmp.ne.s32.totalorder %s139, %s155
      %p157 = scmp.eq.s32.totalorder %s26, 0
      %p158 = por %p156, %p157
      %s159 = smul.u32 %s27, 2
      %s160 = sadd.s32 %s159, %s29
      %s161 = smul.u32 %s46, 2
      %s162 = sadd.s32 %s161, %s38
      %s163 = ssub.s32 %s160, %s162
      %p164 = scmp.eq.s32.totalorder %s163, 0
      %s166 = sadd.s32 %s165, 1
      %s167 = scalar_select %p164, %s165, %s166
      %p170 = pneg %p164
      %p171 = scmp.eq.s32.totalorder %s20, 3
      %p172 = por %p170, %p171
      %p173 = scmp.ne.s32.totalorder %s165, %s168
      %p174 = scmp.eq.s32.totalorder %s20, 0
      %p175 = por %p173, %p174
      %p176 = scmp.ne.s32.totalorder %s165, %s168
      %p177 = scmp.eq.s32.totalorder %s25, 3
      %p178 = por %p176, %p177
      %p179 = scmp.ne.s32.totalorder %s168, %s169
      %p180 = scmp.eq.s32.totalorder %s25, 0
      %p181 = por %p179, %p180
      %p182 = scmp.ne.s32.totalorder %s168, %s169
      %p183 = scmp.eq.s32.totalorder %s26, 3
      %p184 = por %p182, %p183
      %p186 = scmp.ne.s32.totalorder %s169, %s185
      %p187 = scmp.eq.s32.totalorder %s26, 0
      %p188 = por %p186, %p187
      %s189 = ssub.s32 %s27, %s46
      %s190 = ssub.s32 %s28, %s42
      %s191 = sor.u32 %s189, %s190
      %p192 = scmp.eq.s32.totalorder %s191, 0
      %s194 = sadd.s32 %s193, 1
      %s195 = scalar_select %p192, %s193, %s194
      %p198 = pneg %p192
      %p199 = scmp.eq.s32.totalorder %s20, 3
      %p200 = por %p198, %p199
      %p201 = scmp.ne.s32.totalorder %s193, %s196
      %p202 = scmp.eq.s32.totalorder %s20, 0
      %p203 = por %p201, %p202
      %p204 = scmp.ne.s32.totalorder %s193, %s196
      %p205 = scmp.eq.s32.totalorder %s25, 3
      %p206 = por %p204, %p205
      %p207 = scmp.ne.s32.totalorder %s196, %s197
      %p208 = scmp.eq.s32.totalorder %s25, 0
      %p209 = por %p207, %p208
      %p210 = scmp.ne.s32.totalorder %s196, %s197
      %p211 = scmp.eq.s32.totalorder %s26, 3
      %p212 = por %p210, %p211
      %p214 = scmp.ne.s32.totalorder %s197, %s213
      %p215 = scmp.eq.s32.totalorder %s26, 0
      %p216 = por %p214, %p215
      %s217 = ssub.s32 %s27, %s46
      %s218 = ssub.s32 %s28, %s42
      %s219 = sor.u32 %s217, %s218
      %p220 = scmp.eq.s32.totalorder %s219, 0
      %s222 = sadd.s32 %s221, 1
      %s223 = scalar_select %p220, %s221, %s222
      %p226 = pneg %p220
      %p227 = scmp.eq.s32.totalorder %s20, 3
      %p228 = por %p226, %p227
      %p229 = scmp.ne.s32.totalorder %s221, %s224
      %p230 = scmp.eq.s32.totalorder %s20, 0
      %p231 = por %p229, %p230
      %p232 = scmp.ne.s32.totalorder %s221, %s224
      %p233 = scmp.eq.s32.totalorder %s25, 3
      %p234 = por %p232, %p233
      %p235 = scmp.ne.s32.totalorder %s224, %s225
      %p236 = scmp.eq.s32.totalorder %s25, 0
      %p237 = por %p235, %p236
      %p238 = scmp.ne.s32.totalorder %s224, %s225
      %p239 = scmp.eq.s32.totalorder %s26, 3
      %p240 = por %p238, %p239
      %p242 = scmp.ne.s32.totalorder %s225, %s241
      %p243 = scmp.eq.s32.totalorder %s26, 0
      %p244 = por %p242, %p243
      %p245 = scmp.le.s32.totalorder 1, %s20
      %p246 = scmp.lt.s32.totalorder %s20, 5
      %p247 = pnand %p245, %p246
      %p248 = pneg %p247
      // Predicated region
      $region9: #{tpu_custom_call.1} parent=5 // pred_check
        _
      $region10: #{tpu_custom_call.1} parent=5 // pred_check_branch
        %250 = sbr.rel (%p247) target = $region12
      $region11: #{tpu_custom_call.1} parent=5 // pred_region
        %s251 = ssub.s32 %s20, 1
        // Predicated region
        $region13: #{tpu_custom_call.1} parent=11 // pred_check
          %p252 = pneg %p65
        $region14: #{tpu_custom_call.1} parent=11 // pred_check_branch
          %254 = sbr.rel (%p252) target = $region16
        $region15: #{tpu_custom_call.1} parent=11 // pred_region
          %s256 = ssub.s32 256, 256
          %257 = vsyncadd [#allocation4], %s256
          %s258 = smul.addr %s31, 2
          %s259 = smul.addr %s258, 128
          %s260 = scalar_lea.hbm %s0, %s259
          %s262 = sshll.u32 [#allocation3], 4
          %s263 = int_to_ptr.vmem [resolvable:$true] %s262
          %265 = dma.hbm_to_vmem [thread:$0]  %s260, 256, %s263, [#allocation4]
        $region16: #{tpu_custom_call.1} parent=11 // pred_fallthru
          _
        // Predicated region
        $region17: #{tpu_custom_call.1} parent=11 // pred_check
          %p266 = pneg %p91
        $region18: #{tpu_custom_call.1} parent=11 // pred_check_branch
          %268 = sbr.rel (%p266) target = $region20
        $region19: #{tpu_custom_call.1} parent=11 // pred_region
          %p269 = scmp.lt.s32.totalorder %s31, 0
          %s270 = scalar_select %p269, %s31, 0
          %s271 = smul.addr %s270, 8
          %s272 = scalar_lea.vmem %s1, %s271
        $region20: #{tpu_custom_call.1} parent=11 // pred_fallthru
          _
      $region12: #{tpu_custom_call.1} parent=5 // pred_fallthru
        _
      %p273 = scmp.lt.s32.totalorder %s20, 4
      // Predicated region
      $region21: #{tpu_custom_call.1} parent=5 // pred_check
        %p274 = pneg %p273
      $region22: #{tpu_custom_call.1} parent=5 // pred_check_branch
        %276 = sbr.rel (%p274) target = $region24
      $region23: #{tpu_custom_call.1} parent=5 // pred_region
        // Predicated region
        $region25: #{tpu_custom_call.1} parent=23 // pred_check
          %p277 = pneg %p115
        $region26: #{tpu_custom_call.1} parent=23 // pred_check_branch
          %279 = sbr.rel (%p277) target = $region28
        $region27: #{tpu_custom_call.1} parent=23 // pred_region
          %s280 = sand.u32 %s20, 1
          %s281 = scalar_lea.sflag [#allocation7], %s280
          %s282 = sand.u32 %s105, 1
          %s283 = smul.addr %s282, 512
          %s284 = scalar_lea.vmem [#allocation6], %s283
          %s285 = smul.u32 %s27, 2
          %s286 = sadd.s32 %s285, %s29
          %s287 = smul.u32 32, %s286
          %s289 = ssub.s32 8192, 8192
          %290 = vsyncadd %s281, %s289
          %s291 = smul.addr %s287, 2
          %s292 = smul.addr %s291, 128
          %s293 = scalar_lea.hbm %s2, %s292
          %s294 = sshll.u32 %s284, 4
          %s295 = int_to_ptr.vmem [resolvable:$true] %s294
          %300 = dma.hbm_to_vmem [thread:$0]  %s293, 8192, %s295, %s281, 256, 256, 16
        $region28: #{tpu_custom_call.1} parent=23 // pred_fallthru
          _
        // Predicated region
        $region29: #{tpu_custom_call.1} parent=23 // pred_check
          %p301 = pneg %p145
        $region30: #{tpu_custom_call.1} parent=23 // pred_check_branch
          %303 = sbr.rel (%p301) target = $region32
        $region31: #{tpu_custom_call.1} parent=23 // pred_region
          %s304 = sand.u32 %s20, 1
          %s305 = scalar_lea.sflag [#allocation7], %s304
          %s306 = sand.u32 %s135, 1
          %s307 = smul.addr %s306, 256
          %s308 = scalar_lea.vmem [#allocation8], %s307
          %s309 = smul.u32 %s27, 2
          %s310 = sadd.s32 %s309, %s29
          %s311 = smul.u32 32, %s310
          %s313 = ssub.s32 4096, 4096
          %314 = vsyncadd %s305, %s313
          %s315 = smul.addr %s311, 2
          %s316 = smul.addr %s315, 64
          %s317 = scalar_lea.hbm %s3, %s316
          %s318 = sshll.u32 %s308, 4
          %s319 = int_to_ptr.vmem [resolvable:$true] %s318
          %324 = dma.hbm_to_vmem [thread:$0]  %s317, 4096, %s319, %s305, 128, 128, 8
        $region32: #{tpu_custom_call.1} parent=23 // pred_fallthru
          _
        // Predicated region
        $region33: #{tpu_custom_call.1} parent=23 // pred_check
          %p325 = pneg %p175
        $region34: #{tpu_custom_call.1} parent=23 // pred_check_branch
          %327 = sbr.rel (%p325) target = $region36
        $region35: #{tpu_custom_call.1} parent=23 // pred_region
          %s328 = smul.u32 %s27, 2
          %s329 = sadd.s32 %s328, %s29
          %s330 = smul.u32 2, %s329
          %p331 = scmp.lt.s32.totalorder %s330, 7
          %s332 = scalar_select %p331, %s330, 7
          %s333 = smul.addr %s332, 2
          %s334 = scalar_lea.vmem %s4, %s333
          %s335 = smul.u32 %s27, 2
          %s336 = sadd.s32 %s335, %s29
          %s337 = smul.u32 2, %s336
        $region36: #{tpu_custom_call.1} parent=23 // pred_fallthru
          _
      $region24: #{tpu_custom_call.1} parent=5 // pred_fallthru
        _
      %p338 = scmp.le.s32.totalorder 1, %s20
      %p339 = scmp.lt.s32.totalorder %s20, 5
      %p340 = pnand %p338, %p339
      %p341 = pneg %p340
      // Predicated region
      $region37: #{tpu_custom_call.1} parent=5 // pred_check
        _
      $region38: #{tpu_custom_call.1} parent=5 // pred_check_branch
        %343 = sbr.rel (%p340) target = $region40
      $region39: #{tpu_custom_call.1} parent=5 // pred_region
        %s344 = ssub.s32 %s20, 1
        // Predicated region
        $region41: #{tpu_custom_call.1} parent=39 // pred_check
          %p345 = pneg %p65
        $region42: #{tpu_custom_call.1} parent=39 // pred_check_branch
          %347 = sbr.rel (%p345) target = $region44
        $region43: #{tpu_custom_call.1} parent=39 // pred_region
          %348 = dma.done [#allocation4], 256
        $region44: #{tpu_custom_call.1} parent=39 // pred_fallthru
          _
        %s349 = sand.u32 %s25, 1
        %s350 = scalar_lea.sflag [#allocation7], %s349
        %s351 = sand.u32 %s108, 1
        %s352 = smul.addr %s351, 512
        %s353 = scalar_lea.vmem [#allocation6], %s352
        // Predicated region
        $region45: #{tpu_custom_call.1} parent=39 // pred_check
          %p354 = pneg %p121
        $region46: #{tpu_custom_call.1} parent=39 // pred_check_branch
          %356 = sbr.rel (%p354) target = $region48
        $region47: #{tpu_custom_call.1} parent=39 // pred_region
          %357 = dma.done %s350, 8192
        $region48: #{tpu_custom_call.1} parent=39 // pred_fallthru
          _
        %s358 = sand.u32 %s25, 1
        %s359 = scalar_lea.sflag [#allocation7], %s358
        %s360 = sand.u32 %s138, 1
        %s361 = smul.addr %s360, 256
        %s362 = scalar_lea.vmem [#allocation8], %s361
        // Predicated region
        $region49: #{tpu_custom_call.1} parent=39 // pred_check
          %p363 = pneg %p151
        $region50: #{tpu_custom_call.1} parent=39 // pred_check_branch
          %365 = sbr.rel (%p363) target = $region52
        $region51: #{tpu_custom_call.1} parent=39 // pred_region
          %366 = dma.done %s359, 4096
        $region52: #{tpu_custom_call.1} parent=39 // pred_fallthru
          _
        %p367 = pneg %p65
        %p368 = pneg %p62
        %p369 = scmp.lt.s32.totalorder %s31, 0
        %s370 = scalar_select %p369, %s31, 0
        %s371 = smul.addr %s370, 8
        %s372 = scalar_lea.vmem %s1, %s371
        %p373 = pneg %p91
        %p374 = pneg %p88
        %s375 = sand.u32 %s25, 1
        %s376 = scalar_lea.sflag [#allocation7], %s375
        %s377 = sand.u32 %s108, 1
        %s378 = smul.addr %s377, 512
        %s379 = scalar_lea.vmem [#allocation6], %s378
        %p380 = pneg %p121
        %p381 = pneg %p118
        %s382 = sand.u32 %s25, 1
        %s383 = scalar_lea.sflag [#allocation7], %s382
        %s384 = sand.u32 %s138, 1
        %s385 = smul.addr %s384, 256
        %s386 = scalar_lea.vmem [#allocation8], %s385
        %p387 = pneg %p151
        %p388 = pneg %p148
        %s389 = smul.u32 %s30, 2
        %s390 = sadd.s32 %s389, %s32
        %s391 = smul.u32 2, %s390
        %p392 = scmp.lt.s32.totalorder %s391, 7
        %s393 = scalar_select %p392, %s391, 7
        %s394 = smul.addr %s393, 2
        %s395 = scalar_lea.vmem %s4, %s394
        %p396 = pneg %p181
        %p397 = pneg %p178
        %p398 = pneg %p209
        %p399 = pneg %p206
        %s400 = sand.u32 %s196, 1
        %s401 = scalar_lea.sflag [#allocation5], %s400
        %s402 = sand.u32 %s196, 1
        %s403 = smul.addr %s402, 16
        %s404 = scalar_lea.vmem [#allocation9], %s403
        %p405 = pneg %p237
        %p406 = pneg %p234
        %p407 = scmp.lt.s32.totalorder %s30, 1
        %s408 = scalar_select %p407, %s30, 1
        %p409 = scmp.lt.s32.totalorder %s31, 0
        %s410 = scalar_select %p409, %s31, 0
        %s411 = sadd.s32 %s410, %s408
        %s412 = smul.addr %s411, 8
        %s413 = scalar_lea.vmem %s6, %s412
        %p414 = scmp.lt.s32.totalorder %s31, 0
        %s415 = scalar_select %p414, %s31, 0
        %s416 = smul.addr %s415, 8
        %s417 = scalar_lea.vmem %s1, %s416
        %s418 = smul.u32 %s30, 2
        %s419 = sadd.s32 %s418, %s32
        %s420 = smul.u32 32, %s419
        %s421 = smul.u32 %s30, 2
        %s422 = sadd.s32 %s421, %s32
        %s423 = smul.u32 32, %s422
        %s424 = smul.u32 %s30, 2
        %s425 = sadd.s32 %s424, %s32
        %s426 = smul.u32 2, %s425
        %p427 = scmp.lt.s32.totalorder %s426, 7
        %s428 = scalar_select %p427, %s426, 7
        %s429 = smul.addr %s428, 2
        %s430 = scalar_lea.vmem %s4, %s429
        %s431 = smul.u32 %s30, 2
        %s432 = sadd.s32 %s431, %s32
        %s433 = smul.u32 2, %s432
        %p434 = scmp.lt.s32.totalorder %s30, 1
        %s435 = scalar_select %p434, %s30, 1
        %p436 = scmp.lt.s32.totalorder %s31, 0
        %s437 = scalar_select %p436, %s31, 0
        %s438 = sadd.s32 %s437, %s435
        %s439 = smul.addr %s438, 8
        %s440 = scalar_lea.vmem %s6, %s439
        %p441 = scmp.eq.s32.totalorder %s32, 0
        // Predicated region
        $region53: #{tpu_custom_call.1} parent=39 // pred_check
          %p442 = pneg %p441
        $region54: #{tpu_custom_call.1} parent=39 // pred_check_branch
          %444 = sbr.rel (%p442) target = $region56
        $region55: #{tpu_custom_call.1} parent=39 // pred_region
          %445 = vst [vmem:[%s404] sm:$0xff] 0.0
          %446 = vst [vmem:[%s404 + $0x8] sm:$0xff] 0.0
          %vm447 = vcmask 7168
          %448 = vst.msk [vmem:[#allocation2] sm:$0xff] %vm447, 0.0
        $region56: #{tpu_custom_call.1} parent=39 // pred_fallthru
          _
        %v449 = vld [vmem:[#allocation3] sm:$0xff]
        %v450 = vld [vmem:[#allocation3 + $0x8] sm:$0xff]
        %v451 = vld [vmem:[%s353] sm:$0xff]
        %v452 = vld [vmem:[%s353 + $0x8] sm:$0xff]
        %v453 = vld [vmem:[%s353 + $0x10] sm:$0xff]
        %v454 = vld [vmem:[%s353 + $0x18] sm:$0xff]
        %v455 = vld [vmem:[%s353 + $0x20] sm:$0xff]
        %v456 = vld [vmem:[%s353 + $0x28] sm:$0xff]
        %v457 = vld [vmem:[%s353 + $0x30] sm:$0xff]
        %v458 = vld [vmem:[%s353 + $0x38] sm:$0xff]
        %v459 = vld [vmem:[%s353 + $0x40] sm:$0xff]
        %v460 = vld [vmem:[%s353 + $0x48] sm:$0xff]
        %v461 = vld [vmem:[%s353 + $0x50] sm:$0xff]
        %v462 = vld [vmem:[%s353 + $0x58] sm:$0xff]
        %v463 = vld [vmem:[%s353 + $0x60] sm:$0xff]
        %v464 = vld [vmem:[%s353 + $0x68] sm:$0xff]
        %v465 = vld [vmem:[%s353 + $0x70] sm:$0xff]
        %v466 = vld [vmem:[%s353 + $0x78] sm:$0xff]
        %v467 = vld [vmem:[%s353 + $0x80] sm:$0xff]
        %v468 = vld [vmem:[%s353 + $0x88] sm:$0xff]
        %v469 = vld [vmem:[%s353 + $0x90] sm:$0xff]
        %v470 = vld [vmem:[%s353 + $0x98] sm:$0xff]
        %v471 = vld [vmem:[%s353 + $0xa0] sm:$0xff]
        %v472 = vld [vmem:[%s353 + $0xa8] sm:$0xff]
        %v473 = vld [vmem:[%s353 + $0xb0] sm:$0xff]
        %v474 = vld [vmem:[%s353 + $0xb8] sm:$0xff]
        %v475 = vld [vmem:[%s353 + $0xc0] sm:$0xff]
        %v476 = vld [vmem:[%s353 + $0xc8] sm:$0xff]
        %v477 = vld [vmem:[%s353 + $0xd0] sm:$0xff]
        %v478 = vld [vmem:[%s353 + $0xd8] sm:$0xff]
        %v479 = vld [vmem:[%s353 + $0xe0] sm:$0xff]
        %v480 = vld [vmem:[%s353 + $0xe8] sm:$0xff]
        %v481 = vld [vmem:[%s353 + $0xf0] sm:$0xff]
        %v482 = vld [vmem:[%s353 + $0xf8] sm:$0xff]
        %v483 = vld [vmem:[%s353 + $0x100] sm:$0xff]
        %v484 = vld [vmem:[%s353 + $0x108] sm:$0xff]
        %v485 = vld [vmem:[%s353 + $0x110] sm:$0xff]
        %v486 = vld [vmem:[%s353 + $0x118] sm:$0xff]
        %v487 = vld [vmem:[%s353 + $0x120] sm:$0xff]
        %v488 = vld [vmem:[%s353 + $0x128] sm:$0xff]
        %v489 = vld [vmem:[%s353 + $0x130] sm:$0xff]
        %v490 = vld [vmem:[%s353 + $0x138] sm:$0xff]
        %v491 = vld [vmem:[%s353 + $0x140] sm:$0xff]
        %v492 = vld [vmem:[%s353 + $0x148] sm:$0xff]
        %v493 = vld [vmem:[%s353 + $0x150] sm:$0xff]
        %v494 = vld [vmem:[%s353 + $0x158] sm:$0xff]
        %v495 = vld [vmem:[%s353 + $0x160] sm:$0xff]
        %v496 = vld [vmem:[%s353 + $0x168] sm:$0xff]
        %v497 = vld [vmem:[%s353 + $0x170] sm:$0xff]
        %v498 = vld [vmem:[%s353 + $0x178] sm:$0xff]
        %v499 = vld [vmem:[%s353 + $0x180] sm:$0xff]
        %v500 = vld [vmem:[%s353 + $0x188] sm:$0xff]
        %v501 = vld [vmem:[%s353 + $0x190] sm:$0xff]
        %v502 = vld [vmem:[%s353 + $0x198] sm:$0xff]
        %v503 = vld [vmem:[%s353 + $0x1a0] sm:$0xff]
        %v504 = vld [vmem:[%s353 + $0x1a8] sm:$0xff]
        %v505 = vld [vmem:[%s353 + $0x1b0] sm:$0xff]
        %v506 = vld [vmem:[%s353 + $0x1b8] sm:$0xff]
        %v507 = vld [vmem:[%s353 + $0x1c0] sm:$0xff]
        %v508 = vld [vmem:[%s353 + $0x1c8] sm:$0xff]
        %v509 = vld [vmem:[%s353 + $0x1d0] sm:$0xff]
        %v510 = vld [vmem:[%s353 + $0x1d8] sm:$0xff]
        %v511 = vld [vmem:[%s353 + $0x1e0] sm:$0xff]
        %v512 = vld [vmem:[%s353 + $0x1e8] sm:$0xff]
        %v513 = vld [vmem:[%s353 + $0x1f0] sm:$0xff]
        %v514 = vld [vmem:[%s353 + $0x1f8] sm:$0xff]
        %v515 = vld [vmem:[%s362] sm:$0xff]
        %v516 = vld [vmem:[%s362 + $0x8] sm:$0xff]
        %v517 = vld [vmem:[%s362 + $0x10] sm:$0xff]
        %v518 = vld [vmem:[%s362 + $0x18] sm:$0xff]
        %v519 = vld [vmem:[%s362 + $0x20] sm:$0xff]
        %v520 = vld [vmem:[%s362 + $0x28] sm:$0xff]
        %v521 = vld [vmem:[%s362 + $0x30] sm:$0xff]
        %v522 = vld [vmem:[%s362 + $0x38] sm:$0xff]
        %v523 = vld [vmem:[%s362 + $0x40] sm:$0xff]
        %v524 = vld [vmem:[%s362 + $0x48] sm:$0xff]
        %v525 = vld [vmem:[%s362 + $0x50] sm:$0xff]
        %v526 = vld [vmem:[%s362 + $0x58] sm:$0xff]
        %v527 = vld [vmem:[%s362 + $0x60] sm:$0xff]
        %v528 = vld [vmem:[%s362 + $0x68] sm:$0xff]
        %v529 = vld [vmem:[%s362 + $0x70] sm:$0xff]
        %v530 = vld [vmem:[%s362 + $0x78] sm:$0xff]
        %v531 = vld [vmem:[%s362 + $0x80] sm:$0xff]
        %v532 = vld [vmem:[%s362 + $0x88] sm:$0xff]
        %v533 = vld [vmem:[%s362 + $0x90] sm:$0xff]
        %v534 = vld [vmem:[%s362 + $0x98] sm:$0xff]
        %v535 = vld [vmem:[%s362 + $0xa0] sm:$0xff]
        %v536 = vld [vmem:[%s362 + $0xa8] sm:$0xff]
        %v537 = vld [vmem:[%s362 + $0xb0] sm:$0xff]
        %v538 = vld [vmem:[%s362 + $0xb8] sm:$0xff]
        %v539 = vld [vmem:[%s362 + $0xc0] sm:$0xff]
        %v540 = vld [vmem:[%s362 + $0xc8] sm:$0xff]
        %v541 = vld [vmem:[%s362 + $0xd0] sm:$0xff]
        %v542 = vld [vmem:[%s362 + $0xd8] sm:$0xff]
        %v543 = vld [vmem:[%s362 + $0xe0] sm:$0xff]
        %v544 = vld [vmem:[%s362 + $0xe8] sm:$0xff]
        %v545 = vld [vmem:[%s362 + $0xf0] sm:$0xff]
        %v546 = vld [vmem:[%s362 + $0xf8] sm:$0xff]
        %v547 = vpack.c.bf16 %v449, %v449
        %v548 = vpack.c.bf16 %v450, %v450
        %v549 = vld [vmem:[%s430] ss:$2 sm:$0x3]
        %s550 = scalar_lea.vmem %s430, 1
        %v551 = vld [vmem:[%s550] ss:$2 sm:$0x3]
        %552 = vmatprep.subr.mxu0 %v452
        %553 = vmatpush1.xpose.msra.mxu0 %v451
        %554 = vmatprep.subr.mxu0 %v454
        %555 = vmatpush1.xpose.msra.mxu0 %v453
        %556 = vmatprep.subr.mxu0 %v456
        %557 = vmatpush1.xpose.msra.mxu0 %v455
        %558 = vmatprep.subr.mxu0 %v458
        %559 = vmatpush1.xpose.msra.mxu0 %v457
        %560 = vmatprep.subr.mxu0 %v460
        %561 = vmatpush1.xpose.msra.mxu0 %v459
        %562 = vmatprep.subr.mxu0 %v462
        %563 = vmatpush1.xpose.msra.mxu0 %v461
        %564 = vmatprep.subr.mxu0 %v464
        %565 = vmatpush1.xpose.msra.mxu0 %v463
        %566 = vmatprep.subr.mxu0 %v466
        %567 = vmatpush1.xpose.msra.mxu0 %v465
        %568 = vmatprep.subr.mxu0 %v468
        %569 = vmatpush1.xpose.msra.mxu0 %v467
        %570 = vmatprep.subr.mxu0 %v470
        %571 = vmatpush1.xpose.msra.mxu0 %v469
        %572 = vmatprep.subr.mxu0 %v472
        %573 = vmatpush1.xpose.msra.mxu0 %v471
        %574 = vmatprep.subr.mxu0 %v474
        %575 = vmatpush1.xpose.msra.mxu0 %v473
        %576 = vmatprep.subr.mxu0 %v476
        %577 = vmatpush1.xpose.msra.mxu0 %v475
        %578 = vmatprep.subr.mxu0 %v478
        %579 = vmatpush1.xpose.msra.mxu0 %v477
        %580 = vmatprep.subr.mxu0 %v480
        %581 = vmatpush1.xpose.msra.mxu0 %v479
        %582 = vmatprep.subr.mxu0 %v482
        %583 = vmatpush1.xpose.msra.mxu0 %v481
        %584 = vmatprep.subr.mxu0 %v484
        %585 = vmatpush1.xpose.msra.mxu0 %v483
        %586 = vmatprep.subr.mxu0 %v486
        %587 = vmatpush1.xpose.msra.mxu0 %v485
        %588 = vmatprep.subr.mxu0 %v488
        %589 = vmatpush1.xpose.msra.mxu0 %v487
        %590 = vmatprep.subr.mxu0 %v490
        %591 = vmatpush1.xpose.msra.mxu0 %v489
        %592 = vmatprep.subr.mxu0 %v492
        %593 = vmatpush1.xpose.msra.mxu0 %v491
        %594 = vmatprep.subr.mxu0 %v494
        %595 = vmatpush1.xpose.msra.mxu0 %v493
        %596 = vmatprep.subr.mxu0 %v496
        %597 = vmatpush1.xpose.msra.mxu0 %v495
        %598 = vmatprep.subr.mxu0 %v498
        %599 = vmatpush1.xpose.msra.mxu0 %v497
        %600 = vmatprep.subr.mxu0 %v500
        %601 = vmatpush1.xpose.msra.mxu0 %v499
        %602 = vmatprep.subr.mxu0 %v502
        %603 = vmatpush1.xpose.msra.mxu0 %v501
        %604 = vmatprep.subr.mxu0 %v504
        %605 = vmatpush1.xpose.msra.mxu0 %v503
        %606 = vmatprep.subr.mxu0 %v506
        %607 = vmatpush1.xpose.msra.mxu0 %v505
        %608 = vmatprep.subr.mxu0 %v508
        %609 = vmatpush1.xpose.msra.mxu0 %v507
        %610 = vmatprep.subr.mxu0 %v510
        %611 = vmatpush1.xpose.msra.mxu0 %v509
        %612 = vmatprep.subr.mxu0 %v512
        %613 = vmatpush1.xpose.msra.mxu0 %v511
        %614 = vmatprep.subr.mxu0 %v514
        %615 = vmatpush1.xpose.msra.mxu0 %v513
        %616 = vmatprep.mubr.f32.mxu0 %v450
        %617 = vmatmul.mubr.f32.gmra.mrb[0].mxu0 %v449
        %v618 = vpop.f32.mrb[0].mxu0
        %v619 = vadd.f32 0.0, %v618
        %v620 = vpop.f32.mrb[0].mxu0
        %v621 = vadd.f32 0.0, %v620
        %622 = vdwg.mxu0
        %v623 = vld [vmem:[%s417] sm:$0xff]
        %625 = vset.pattern.permute.xlu0 0
        %626 = vperm.xlu0 %625, %v623
        %v627 = vpop.permute.xlu0 %626
        %v630 = vlaneseq
        %v631 = vshrl.u32 %v630, 7
        %v632 = vsub.s32 0, %v631
        %v633 = vrot.slane %v549, %v632
        %v634 = vlaneseq
        %v635 = vshrl.u32 %v634, 7
        %v636 = vsub.s32 1, %v635
        %v637 = vrot.slane %v549, %v636
        %v640 = vadd.f32 %v627, %v633
        %v641 = vadd.f32 %v627, %v637
        %v642 = vmul.f32 %v619, 2.0
        %v643 = vmul.f32 %v621, 2.0
        %v644 = vsub.f32 %v640, %v642
        %v645 = vsub.f32 %v641, %v643
        %v646 = vmax.f32 %v644, 0.0
        %v647 = vmax.f32 %v645, 0.0
        %v648 = vrsqrt.pop %v646
        %v649 = vmul.f32 %v646, %v648
        %vm650 = vcmp.eq.f32.partialorder %v646, inf
        %v651 = vsel %vm650, %v646, %v649
        %vm652 = vcmp.eq.f32.partialorder %v646, 0.0
        %v653 = vand.u32 %v646, 2147483648
        %v654 = vsel %vm652, %v653, %v651
        %v655 = vrsqrt.pop %v647
        %v656 = vmul.f32 %v647, %v655
        %vm657 = vcmp.eq.f32.partialorder %v647, inf
        %v658 = vsel %vm657, %v647, %v656
        %vm659 = vcmp.eq.f32.partialorder %v647, 0.0
        %v660 = vand.u32 %v647, 2147483648
        %v661 = vsel %vm659, %v660, %v658
        %v694 = vunpack.c.l.b16 %v515
        %v695 = vunpack.c.h.b16 %v515
        %v696 = vunpack.c.l.b16 %v516
        %v697 = vunpack.c.h.b16 %v516
        %v698 = vunpack.c.l.b16 %v517
        %v699 = vunpack.c.h.b16 %v517
        %v700 = vunpack.c.l.b16 %v518
        %v701 = vunpack.c.h.b16 %v518
        %v702 = vunpack.c.l.b16 %v519
        %v703 = vunpack.c.h.b16 %v519
        %v704 = vunpack.c.l.b16 %v520
        %v705 = vunpack.c.h.b16 %v520
        %v706 = vunpack.c.l.b16 %v521
        %v707 = vunpack.c.h.b16 %v521
        %v708 = vunpack.c.l.b16 %v522
        %v709 = vunpack.c.h.b16 %v522
        %v710 = vunpack.c.l.b16 %v523
        %v711 = vunpack.c.h.b16 %v523
        %v712 = vunpack.c.l.b16 %v524
        %v713 = vunpack.c.h.b16 %v524
        %v714 = vunpack.c.l.b16 %v525
        %v715 = vunpack.c.h.b16 %v525
        %v716 = vunpack.c.l.b16 %v526
        %v717 = vunpack.c.h.b16 %v526
        %v718 = vunpack.c.l.b16 %v527
        %v719 = vunpack.c.h.b16 %v527
        %v720 = vunpack.c.l.b16 %v528
        %v721 = vunpack.c.h.b16 %v528
        %v722 = vunpack.c.l.b16 %v529
        %v723 = vunpack.c.h.b16 %v529
        %v724 = vunpack.c.l.b16 %v530
        %v725 = vunpack.c.h.b16 %v530
        %v726 = vunpack.c.l.b16 %v531
        %v727 = vunpack.c.h.b16 %v531
        %v728 = vunpack.c.l.b16 %v532
        %v729 = vunpack.c.h.b16 %v532
        %v730 = vunpack.c.l.b16 %v533
        %v731 = vunpack.c.h.b16 %v533
        %v732 = vunpack.c.l.b16 %v534
        %v733 = vunpack.c.h.b16 %v534
        %v734 = vunpack.c.l.b16 %v535
        %v735 = vunpack.c.h.b16 %v535
        %v736 = vunpack.c.l.b16 %v536
        %v737 = vunpack.c.h.b16 %v536
        %v738 = vunpack.c.l.b16 %v537
        %v739 = vunpack.c.h.b16 %v537
        %v740 = vunpack.c.l.b16 %v538
        %v741 = vunpack.c.h.b16 %v538
        %v742 = vunpack.c.l.b16 %v539
        %v743 = vunpack.c.h.b16 %v539
        %v744 = vunpack.c.l.b16 %v540
        %v745 = vunpack.c.h.b16 %v540
        %v746 = vunpack.c.l.b16 %v541
        %v747 = vunpack.c.h.b16 %v541
        %v748 = vunpack.c.l.b16 %v542
        %v749 = vunpack.c.h.b16 %v542
        %v750 = vunpack.c.l.b16 %v543
        %v751 = vunpack.c.h.b16 %v543
        %v752 = vunpack.c.l.b16 %v544
        %v753 = vunpack.c.h.b16 %v544
        %v754 = vunpack.c.l.b16 %v545
        %v755 = vunpack.c.h.b16 %v545
        %v756 = vunpack.c.l.b16 %v546
        %v757 = vunpack.c.h.b16 %v546
        %v758 = vpack.c.b16 %v696, %v694
        %v759 = vpack.c.b16 %v697, %v695
        %v760 = vpack.c.b16 %v700, %v698
        %v761 = vpack.c.b16 %v701, %v699
        %v762 = vpack.c.b16 %v704, %v702
        %v763 = vpack.c.b16 %v705, %v703
        %v764 = vpack.c.b16 %v708, %v706
        %v765 = vpack.c.b16 %v709, %v707
        %v766 = vpack.c.b16 %v712, %v710
        %v767 = vpack.c.b16 %v713, %v711
        %v768 = vpack.c.b16 %v716, %v714
        %v769 = vpack.c.b16 %v717, %v715
        %v770 = vpack.c.b16 %v720, %v718
        %v771 = vpack.c.b16 %v721, %v719
        %v772 = vpack.c.b16 %v724, %v722
        %v773 = vpack.c.b16 %v725, %v723
        %v774 = vpack.c.b16 %v728, %v726
        %v775 = vpack.c.b16 %v729, %v727
        %v776 = vpack.c.b16 %v732, %v730
        %v777 = vpack.c.b16 %v733, %v731
        %v778 = vpack.c.b16 %v736, %v734
        %v779 = vpack.c.b16 %v737, %v735
        %v780 = vpack.c.b16 %v740, %v738
        %v781 = vpack.c.b16 %v741, %v739
        %v782 = vpack.c.b16 %v744, %v742
        %v783 = vpack.c.b16 %v745, %v743
        %v784 = vpack.c.b16 %v748, %v746
        %v785 = vpack.c.b16 %v749, %v747
        %v786 = vpack.c.b16 %v752, %v750
        %v787 = vpack.c.b16 %v753, %v751
        %v788 = vpack.c.b16 %v756, %v754
        %v789 = vpack.c.b16 %v757, %v755
        %822 = vmatprep.subr.bf16.mxu0 %v759
        %823 = vmatpush1.bf16.xpose.msra.mxu0 %v758
        %824 = vmatprep.subr.bf16.mxu0 %v761
        %825 = vmatpush1.bf16.xpose.msra.mxu0 %v760
        %826 = vmatprep.subr.bf16.mxu0 %v763
        %827 = vmatpush1.bf16.xpose.msra.mxu0 %v762
        %828 = vmatprep.subr.bf16.mxu0 %v765
        %829 = vmatpush1.bf16.xpose.msra.mxu0 %v764
        %830 = vmatprep.subr.bf16.mxu0 %v767
        %831 = vmatpush1.bf16.xpose.msra.mxu0 %v766
        %832 = vmatprep.subr.bf16.mxu0 %v769
        %833 = vmatpush1.bf16.xpose.msra.mxu0 %v768
        %834 = vmatprep.subr.bf16.mxu0 %v771
        %835 = vmatpush1.bf16.xpose.msra.mxu0 %v770
        %836 = vmatprep.subr.bf16.mxu0 %v773
        %837 = vmatpush1.bf16.xpose.msra.mxu0 %v772
        %838 = vmatprep.subr.bf16.mxu0 %v775
        %839 = vmatpush1.bf16.xpose.msra.mxu0 %v774
        %840 = vmatprep.subr.bf16.mxu0 %v777
        %841 = vmatpush1.bf16.xpose.msra.mxu0 %v776
        %842 = vmatprep.subr.bf16.mxu0 %v779
        %843 = vmatpush1.bf16.xpose.msra.mxu0 %v778
        %844 = vmatprep.subr.bf16.mxu0 %v781
        %845 = vmatpush1.bf16.xpose.msra.mxu0 %v780
        %846 = vmatprep.subr.bf16.mxu0 %v783
        %847 = vmatpush1.bf16.xpose.msra.mxu0 %v782
        %848 = vmatprep.subr.bf16.mxu0 %v785
        %849 = vmatpush1.bf16.xpose.msra.mxu0 %v784
        %850 = vmatprep.subr.bf16.mxu0 %v787
        %851 = vmatpush1.bf16.xpose.msra.mxu0 %v786
        %852 = vmatprep.subr.bf16.mxu0 %v789
        %853 = vmatpush1.bf16.xpose.msra.mxu0 %v788
        %854 = vmatprep.mubr.bf16.mxu0 %v548
        %855 = vmatmul.mubr.bf16.gmra.mrb[0].mxu0 %v547
        %v856 = vpop.f32.mrb[0].mxu0
        %v857 = vadd.f32 0.0, %v856
        %v858 = vpop.f32.mrb[0].mxu0
        %v859 = vadd.f32 0.0, %v858
        %v860 = vpop.f32.mrb[0].mxu0
        %v861 = vpop.f32.mrb[0].mxu0
        %862 = vdwg.mxu0
        %v864 = vlaneseq
        %v865 = vshrl.u32 %v864, 7
        %v866 = vsub.s32 0, %v865
        %v867 = vrot.slane %v551, %v866
        %v868 = vlaneseq
        %v869 = vshrl.u32 %v868, 7
        %v870 = vsub.s32 1, %v869
        %v871 = vrot.slane %v551, %v870
        %v874 = vsub.f32 %v857, %v867
        %v875 = vsub.f32 %v859, %v871
        %v876 = vsub.f32 0.0, %v654
        %v877 = vsub.f32 0.0, %v661
        %v878 = vmul.f32 %v876, 1.442695
        %v879 = vpow.pop %v878
        %v880 = vmul.f32 %v877, 1.442695
        %v881 = vpow.pop %v880
        %v882 = vadd.f32 %v654, 1.0
        %v883 = vadd.f32 %v661, 1.0
        %v884 = vmul.f32 %v879, %v882
        %v885 = vmul.f32 %v881, %v883
        %v886 = vmul.f32 %v879, %v874
        %v887 = vmul.f32 %v881, %v875
        %v888 = vadd.f32 %v886, %v887
        %889 = vadd.xlane.f32.xlu0 %v888
        %v890 = vpop.xlane.xlu0 %889
        %v891 = vmul.f32 %v890, %v449
        %v892 = vmul.f32 %v890, %v450
        %v893 = vpack.c.bf16 %v886, %v886
        %v894 = vpack.c.bf16 %v887, %v887
        %v895 = vpack.c.bf16 %v453, %v451
        %v896 = vpack.c.bf16 %v454, %v452
        %v897 = vpack.c.bf16 %v457, %v455
        %v898 = vpack.c.bf16 %v458, %v456
        %v899 = vpack.c.bf16 %v461, %v459
        %v900 = vpack.c.bf16 %v462, %v460
        %v901 = vpack.c.bf16 %v465, %v463
        %v902 = vpack.c.bf16 %v466, %v464
        %v903 = vpack.c.bf16 %v469, %v467
        %v904 = vpack.c.bf16 %v470, %v468
        %v905 = vpack.c.bf16 %v473, %v471
        %v906 = vpack.c.bf16 %v474, %v472
        %v907 = vpack.c.bf16 %v477, %v475
        %v908 = vpack.c.bf16 %v478, %v476
        %v909 = vpack.c.bf16 %v481, %v479
        %v910 = vpack.c.bf16 %v482, %v480
        %v911 = vpack.c.bf16 %v485, %v483
        %v912 = vpack.c.bf16 %v486, %v484
        %v913 = vpack.c.bf16 %v489, %v487
        %v914 = vpack.c.bf16 %v490, %v488
        %v915 = vpack.c.bf16 %v493, %v491
        %v916 = vpack.c.bf16 %v494, %v492
        %v917 = vpack.c.bf16 %v497, %v495
        %v918 = vpack.c.bf16 %v498, %v496
        %v919 = vpack.c.bf16 %v501, %v499
        %v920 = vpack.c.bf16 %v502, %v500
        %v921 = vpack.c.bf16 %v505, %v503
        %v922 = vpack.c.bf16 %v506, %v504
        %v923 = vpack.c.bf16 %v509, %v507
        %v924 = vpack.c.bf16 %v510, %v508
        %v925 = vpack.c.bf16 %v513, %v511
        %v926 = vpack.c.bf16 %v514, %v512
        %927 = vmatprep.subr.bf16.mxu0 %v896
        %928 = vmatpush1.bf16.msra.mxu0 %v895
        %929 = vmatprep.subr.bf16.mxu0 %v898
        %930 = vmatpush1.bf16.msra.mxu0 %v897
        %931 = vmatprep.subr.bf16.mxu0 %v900
        %932 = vmatpush1.bf16.msra.mxu0 %v899
        %933 = vmatprep.subr.bf16.mxu0 %v902
        %934 = vmatpush1.bf16.msra.mxu0 %v901
        %935 = vmatprep.subr.bf16.mxu0 %v904
        %936 = vmatpush1.bf16.msra.mxu0 %v903
        %937 = vmatprep.subr.bf16.mxu0 %v906
        %938 = vmatpush1.bf16.msra.mxu0 %v905
        %939 = vmatprep.subr.bf16.mxu0 %v908
        %940 = vmatpush1.bf16.msra.mxu0 %v907
        %941 = vmatprep.subr.bf16.mxu0 %v910
        %942 = vmatpush1.bf16.msra.mxu0 %v909
        %943 = vmatprep.subr.bf16.mxu0 %v912
        %944 = vmatpush1.bf16.msra.mxu0 %v911
        %945 = vmatprep.subr.bf16.mxu0 %v914
        %946 = vmatpush1.bf16.msra.mxu0 %v913
        %947 = vmatprep.subr.bf16.mxu0 %v916
        %948 = vmatpush1.bf16.msra.mxu0 %v915
        %949 = vmatprep.subr.bf16.mxu0 %v918
        %950 = vmatpush1.bf16.msra.mxu0 %v917
        %951 = vmatprep.subr.bf16.mxu0 %v920
        %952 = vmatpush1.bf16.msra.mxu0 %v919
        %953 = vmatprep.subr.bf16.mxu0 %v922
        %954 = vmatpush1.bf16.msra.mxu0 %v921
        %955 = vmatprep.subr.bf16.mxu0 %v924
        %956 = vmatpush1.bf16.msra.mxu0 %v923
        %957 = vmatprep.subr.bf16.mxu0 %v926
        %958 = vmatpush1.bf16.msra.mxu0 %v925
        %959 = vmatprep.mubr.bf16.mxu0 %v894
        %960 = vmatmul.mubr.bf16.gmra.mrb[0].mxu0 %v893
        %v961 = vpop.f32.mrb[0].mxu0
        %v962 = vadd.f32 0.0, %v961
        %v963 = vpop.f32.mrb[0].mxu0
        %v964 = vadd.f32 0.0, %v963
        %v965 = vpop.f32.mrb[0].mxu0
        %v966 = vpop.f32.mrb[0].mxu0
        %967 = vdwg.mxu0
        %v968 = vsub.f32 %v891, %v962
        %v969 = vsub.f32 %v892, %v964
        %v970 = vpack.c.bf16 %v884, %v884
        %v971 = vpack.c.bf16 %v885, %v885
        %972 = vmatprep.subr.bf16.mxu0 %v759
        %973 = vmatpush1.bf16.msra.mxu0 %v758
        %974 = vmatprep.subr.bf16.mxu0 %v761
        %975 = vmatpush1.bf16.msra.mxu0 %v760
        %976 = vmatprep.subr.bf16.mxu0 %v763
        %977 = vmatpush1.bf16.msra.mxu0 %v762
        %978 = vmatprep.subr.bf16.mxu0 %v765
        %979 = vmatpush1.bf16.msra.mxu0 %v764
        %980 = vmatprep.subr.bf16.mxu0 %v767
        %981 = vmatpush1.bf16.msra.mxu0 %v766
        %982 = vmatprep.subr.bf16.mxu0 %v769
        %983 = vmatpush1.bf16.msra.mxu0 %v768
        %984 = vmatprep.subr.bf16.mxu0 %v771
        %985 = vmatpush1.bf16.msra.mxu0 %v770
        %986 = vmatprep.subr.bf16.mxu0 %v773
        %987 = vmatpush1.bf16.msra.mxu0 %v772
        %988 = vmatprep.subr.bf16.mxu0 %v775
        %989 = vmatpush1.bf16.msra.mxu0 %v774
        %990 = vmatprep.subr.bf16.mxu0 %v777
        %991 = vmatpush1.bf16.msra.mxu0 %v776
        %992 = vmatprep.subr.bf16.mxu0 %v779
        %993 = vmatpush1.bf16.msra.mxu0 %v778
        %994 = vmatprep.subr.bf16.mxu0 %v781
        %995 = vmatpush1.bf16.msra.mxu0 %v780
        %996 = vmatprep.subr.bf16.mxu0 %v783
        %997 = vmatpush1.bf16.msra.mxu0 %v782
        %998 = vmatprep.subr.bf16.mxu0 %v785
        %999 = vmatpush1.bf16.msra.mxu0 %v784
        %1000 = vmatprep.subr.bf16.mxu0 %v787
        %1001 = vmatpush1.bf16.msra.mxu0 %v786
        %1002 = vmatprep.subr.bf16.mxu0 %v789
        %1003 = vmatpush1.bf16.msra.mxu0 %v788
        %1004 = vmatprep.mubr.bf16.mxu0 %v971
        %1005 = vmatmul.mubr.bf16.gmra.mrb[0].mxu0 %v970
        %v1006 = vpop.f32.mrb[0].mxu0
        %v1007 = vadd.f32 0.0, %v1006
        %v1008 = vpop.f32.mrb[0].mxu0
        %v1009 = vadd.f32 0.0, %v1008
        %v1010 = vpop.f32.mrb[0].mxu0
        %v1011 = vpop.f32.mrb[0].mxu0
        %1012 = vdwg.mxu0
        %v1013 = vld [vmem:[%s404] sm:$0xff]
        %v1014 = vld [vmem:[%s404 + $0x8] sm:$0xff]
        %v1015 = vsub.f32 %v968, %v1007
        %v1016 = vsub.f32 %v969, %v1009
        %v1017 = vadd.f32 %v1013, %v1015
        %v1018 = vadd.f32 %v1014, %v1016
        %1019 = vst [vmem:[%s404] sm:$0xff] %v1017
        %1020 = vst [vmem:[%s404 + $0x8] sm:$0xff] %v1018
        %v1021 = vld [vmem:[#allocation2] sm:$0xff]
        %v1022 = vmul.f32 %v884, %v874
        %v1023 = vmul.f32 %v885, %v875
        %v1024 = vadd.f32 %v1022, %v1023
        %1025 = vadd.xlane.f32.xlu0 %v1024
        %v1026 = vpop.xlane.xlu0 %1025
        %v1027 = vadd.f32 %v1021, %v1026
        %vm1028 = vcmask 7168
        %1029 = vst.msk [vmem:[#allocation2] sm:$0xff] %vm1028, %v1027
        %p1030 = scmp.eq.s32.totalorder %s32, 1
        // Predicated region
        $region57: #{tpu_custom_call.1} parent=39 // pred_check
          %p1031 = pneg %p1030
        $region58: #{tpu_custom_call.1} parent=39 // pred_check_branch
          %1033 = sbr.rel (%p1031) target = $region60
        $region59: #{tpu_custom_call.1} parent=39 // pred_region
          %v1034 = vld [vmem:[#allocation2] sm:$0xff]
          %1035 = vst.msk [vmem:[%s440] sm:$0xff] %vm1028, %v1034
        $region60: #{tpu_custom_call.1} parent=39 // pred_fallthru
          _
        %s1036 = sand.u32 %s196, 1
        %s1037 = scalar_lea.sflag [#allocation5], %s1036
        %s1038 = sand.u32 %s196, 1
        %s1039 = smul.addr %s1038, 16
        %s1040 = scalar_lea.vmem [#allocation9], %s1039
        %p1041 = scmp.lt.s32.totalorder %s30, 1
        %s1042 = scalar_select %p1041, %s30, 1
        %p1043 = scmp.lt.s32.totalorder %s31, 0
        %s1044 = scalar_select %p1043, %s31, 0
        %s1045 = sadd.s32 %s1044, %s1042
        %s1046 = smul.addr %s1045, 8
        %s1047 = scalar_lea.vmem %s6, %s1046
        // Predicated region
        $region61: #{tpu_custom_call.1} parent=39 // pred_check
          %p1048 = pneg %p206
        $region62: #{tpu_custom_call.1} parent=39 // pred_check_branch
          %1050 = sbr.rel (%p1048) target = $region64
        $region63: #{tpu_custom_call.1} parent=39 // pred_region
          %s1052 = ssub.s32 256, 256
          %1053 = vsyncadd %s1037, %s1052
          %s1054 = smul.addr %s31, 2
          %s1055 = smul.addr %s30, 2
          %s1056 = sadd.s32 %s1054, %s1055
          %s1057 = smul.addr %s1056, 128
          %s1058 = scalar_lea.hbm %s5, %s1057
          %s1060 = sshll.u32 %s1040, 4
          %s1061 = int_to_ptr.vmem [resolvable:$true] %s1060
          %1063 = dma.vmem_to_hbm [thread:$0]  %s1061, 256, %s1058, %s1037
        $region64: #{tpu_custom_call.1} parent=39 // pred_fallthru
          _
        // Predicated region
        $region65: #{tpu_custom_call.1} parent=39 // pred_check
          %p1064 = pneg %p234
        $region66: #{tpu_custom_call.1} parent=39 // pred_check_branch
          %1066 = sbr.rel (%p1064) target = $region68
        $region67: #{tpu_custom_call.1} parent=39 // pred_region
          _
        $region68: #{tpu_custom_call.1} parent=39 // pred_fallthru
          _
      $region40: #{tpu_custom_call.1} parent=5 // pred_fallthru
        _
      %p1067 = scmp.le.s32.totalorder 2, %s20
      // Predicated region
      $region69: #{tpu_custom_call.1} parent=5 // pred_check
        %p1068 = pneg %p1067
      $region70: #{tpu_custom_call.1} parent=5 // pred_check_branch
        %1070 = sbr.rel (%p1068) target = $region72
      $region71: #{tpu_custom_call.1} parent=5 // pred_region
        %s1071 = ssub.s32 %s20, 2
        // Predicated region
        $region73: #{tpu_custom_call.1} parent=71 // pred_check
          %p1072 = pneg %p212
        $region74: #{tpu_custom_call.1} parent=71 // pred_check_branch
          %1074 = sbr.rel (%p1072) target = $region76
        $region75: #{tpu_custom_call.1} parent=71 // pred_region
          %s1075 = sand.u32 %s197, 1
          %s1076 = scalar_lea.sflag [#allocation5], %s1075
          %s1077 = sand.u32 %s197, 1
          %s1078 = smul.addr %s1077, 16
          %s1079 = scalar_lea.vmem [#allocation9], %s1078
          %1080 = dma.done %s1076, 256
        $region76: #{tpu_custom_call.1} parent=71 // pred_fallthru
          _
        // Predicated region
        $region77: #{tpu_custom_call.1} parent=71 // pred_check
          %p1081 = pneg %p240
        $region78: #{tpu_custom_call.1} parent=71 // pred_check_branch
          %1083 = sbr.rel (%p1081) target = $region80
        $region79: #{tpu_custom_call.1} parent=71 // pred_region
          %p1084 = scmp.lt.s32.totalorder %s33, 1
          %s1085 = scalar_select %p1084, %s33, 1
          %p1086 = scmp.lt.s32.totalorder %s34, 0
          %s1087 = scalar_select %p1086, %s34, 0
          %s1088 = sadd.s32 %s1087, %s1085
          %s1089 = smul.addr %s1088, 8
          %s1090 = scalar_lea.vmem %s6, %s1089
        $region80: #{tpu_custom_call.1} parent=71 // pred_fallthru
          _
      $region72: #{tpu_custom_call.1} parent=5 // pred_fallthru
        _
    $region6: #{tpu_custom_call.1} parent=1 // loop_footer
      %s24 = sadd.s32 1, %s20
    $region7: #{tpu_custom_call.1} parent=1 // loop_footer_branch
      %19 = sbr.rel target = $region3
    $region8: #{tpu_custom_call.1} parent=1 // loop_exit
      _
    %1091 = vsyncpa [#allocation4], 1
    %s1092 = scalar_lea.sflag [#allocation4], 1
    %1093 = vsyncpa %s1092, 1
    %1094 = vsyncpa [#allocation7], 1
    %s1095 = scalar_lea.sflag [#allocation7], 1
    %1096 = vsyncpa %s1095, 1
    %1097 = vsyncpa [#allocation5], 1
    %s1098 = scalar_lea.sflag [#allocation5], 1
    %1099 = vsyncpa %s1098, 1

</llo_original>
